<compile_context>
chip_gen: v6e
topology: v6e:2x2x1
jax: 0.10.0
libtpu: 0.0.40
codegen_flags: <defaults>
</compile_context>

<pallas_src>
import functools

import jax
import jax.numpy as jnp
from jax.experimental import pallas as pl
from jax.experimental.pallas import tpu as pltpu

HIDDEN = 20   # QNet's fixed hidden width
LANE = 128    # TPU lane width


def _qnet_kernel(p_ref, x_ref, out_ref, *, in_features, out_features):
    """p_ref: (hidden, in+1+out+1) packed params; x_ref: (in, TB); out_ref: (out, TB)."""
    p = p_ref[...]                                   # one small resident tile
    x = x_ref[...]                                   # (in, TB), batch on lanes

    w1 = p[:, :in_features]                                          # (H, in)
    b1 = p[:, in_features:in_features + 1]                           # (H, 1)
    w2 = p[:, in_features + 1:in_features + 1 + out_features]        # (H, out)
    b2 = p[:out_features,
           in_features + 1 + out_features:in_features + 2 + out_features]  # (out, 1)

    # ---- layer 1: h = relu(W1 @ x + b1), as `in_features` rank-1 FMAs (pure VPU, exact f32)
    acc = w1[:, 0:1] * x[0:1, :]                     # (H, TB)
    for k in range(1, in_features):
        acc = acc + w1[:, k:k + 1] * x[k:k + 1, :]
    h = jnp.maximum(acc + b1, 0.0)                   # (H, TB)

    # ---- layer 2: q = W2 @ h + b2, per-output elementwise mul + sublane reduce (VPU + XLU)
    rows = []
    for o in range(out_features):
        rows.append(jnp.sum(h * w2[:, o:o + 1], axis=0, keepdims=True))  # (1, TB)
    q = jnp.concatenate(rows, axis=0) + b2           # (out, TB)

    out_ref[...] = q.astype(out_ref.dtype)           # single lane-dense store


def qnet_forward(x, w1, b1, w2, b2):
    """QNet forward. x: (B, in) f32. Params in PyTorch nn.Linear layout:
       w1 (hidden, in), b1 (hidden,), w2 (out, hidden), b2 (out,). Returns (B, out) f32."""
    B, in_features = x.shape
    out_features, hidden = w2.shape
    assert w1.shape == (hidden, in_features)

    # --- pack all params into a single f32 slab -> one DMA, sliced in-kernel.
    pcols = in_features + 1 + out_features + 1
    slab = jnp.zeros((hidden, pcols), jnp.float32)
    slab = slab.at[:, :in_features].set(w1.astype(jnp.float32))
    slab = slab.at[:, in_features].set(b1.astype(jnp.float32))
    slab = slab.at[:, in_features + 1:in_features + 1 + out_features].set(
        w2.T.astype(jnp.float32))
    slab = slab.at[:out_features, in_features + 1 + out_features].set(
        b2.astype(jnp.float32))

    # --- batch on the lane dim: pad to a multiple of 128, transpose to (in, Bp).
    Bp = ((B + LANE - 1) // LANE) * LANE
    xT = jnp.pad(x.astype(jnp.float32), ((0, Bp - B), (0, 0))).T      # (in, Bp)

    # Lane-dense batch tile; even the largest choice is far below VMEM limits
    # on v5e/v6e (128 MiB) and v7x (64 MiB) at these feature widths.
    tb = next(t for t in (2048, 1024, 512, 256, LANE) if Bp % t == 0)
    grid = (Bp // tb,)

    kernel = functools.partial(_qnet_kernel,
                               in_features=in_features,
                               out_features=out_features)

    outT = pl.pallas_call(
        kernel,
        out_shape=jax.ShapeDtypeStruct((out_features, Bp), jnp.float32),
        grid_spec=pltpu.PrefetchScalarGridSpec(
            num_scalar_prefetch=0,
            grid=grid,
            in_specs=[
                # params: constant block index -> DMA'd once, resident across steps
                pl.BlockSpec((hidden, pcols), lambda i: (0, 0)),
                # x: stream one lane-dense batch tile per grid step
                pl.BlockSpec((in_features, tb), lambda i: (0, i)),
            ],
            out_specs=pl.BlockSpec((out_features, tb), lambda i: (0, i)),
        ),
        compiler_params=pltpu.CompilerParams(
            # batch tiles are independent -> megacore-shard on v7x, pipeline elsewhere
            dimension_semantics=("parallel",),
        ),
    )(slab, xT)

    return outT[:, :B].T                                              # (B, out)


def init_qnet_params(key, in_features, out_features, hidden=HIDDEN):
    """Deterministic init matching nn.Linear's U(-1/sqrt(fan_in), 1/sqrt(fan_in)),
    stored in PyTorch layout: w (out_dim, in_dim), b (out_dim,)."""
    k1, k2, k3, k4 = jax.random.split(key, 4)
    lim1 = 1.0 / (in_features ** 0.5)
    lim2 = 1.0 / (hidden ** 0.5)
    w1 = jax.random.uniform(k1, (hidden, in_features), jnp.float32, -lim1, lim1)
    b1 = jax.random.uniform(k2, (hidden,), jnp.float32, -lim1, lim1)
    w2 = jax.random.uniform(k3, (out_features, hidden), jnp.float32, -lim2, lim2)
    b2 = jax.random.uniform(k4, (out_features,), jnp.float32, -lim2, lim2)
    return w1, b1, w2, b2


def qnet_reference(x, w1, b1, w2, b2):
    # HIGHEST precision so the reference is true f32 like the VPU kernel path.
    h = jnp.maximum(
        jnp.dot(x, w1.T, precision=jax.lax.Precision.HIGHEST) + b1, 0.0)
    return jnp.dot(h, w2.T, precision=jax.lax.Precision.HIGHEST) + b2


if __name__ == "__main__":
    # CartPole-v1: observation dim 4, action dim 2. Batch not a multiple of 128
    # to exercise the padding + multi-step "parallel" grid path.
    in_features, out_features, batch = 4, 2, 300

    key = jax.random.PRNGKey(0)
    kx, kp = jax.random.split(key)
    x = jax.random.normal(kx, (batch, in_features), dtype=jnp.float32)
    w1, b1, w2, b2 = init_qnet_params(kp, in_features, out_features)

    out = qnet_forward(x, w1, b1, w2, b2)
    out = jax.block_until_ready(out)

    ref = qnet_reference(x, w1, b1, w2, b2)
    assert out.shape == (batch, out_features)
    assert jnp.allclose(out, ref, atol=1e-5, rtol=1e-5), \
        float(jnp.max(jnp.abs(out - ref)))

    print("KERNEL_OK")
</pallas_src>

<mosaic_0001>
module attributes {stable_mosaic.version = 11 : i64} {
  func.func @_qnet_kernel(%arg0: i32, %arg1: memref<20x8xf32, #tpu.memory_space<vmem>>, %arg2: memref<4x128xf32, #tpu.memory_space<vmem>>, %arg3: memref<2x128xf32, #tpu.memory_space<vmem>>) attributes {dimension_semantics = [#tpu.dimension_semantics<parallel>], iteration_bounds = array<i64: 3>, scalar_prefetch = 0 : i64, scratch_operands = 0 : i64, tpu.core_type = #tpu.core_type<tc>, window_params = [{pipeline_mode = #tpu.pipeline_mode<synchronous>, transform_indices = @transform_0, window_bounds = array<i64: 20, 8>}, {transform_indices = @transform_1, window_bounds = array<i64: 4, 128>}, {transform_indices = @transform_2, window_bounds = array<i64: 2, 128>}]} {
    %c0 = arith.constant 0 : index
    %c0_0 = arith.constant 0 : index
    %0 = vector.load %arg1[%c0, %c0_0] : memref<20x8xf32, #tpu.memory_space<vmem>>, vector<20x8xf32>
    %c0_1 = arith.constant 0 : index
    %c0_2 = arith.constant 0 : index
    %1 = vector.load %arg2[%c0_1, %c0_2] : memref<4x128xf32, #tpu.memory_space<vmem>>, vector<4x128xf32>
    %2 = vector.extract_strided_slice %0 {offsets = [0, 0], sizes = [20, 4], strides = [1, 1]} : vector<20x8xf32> to vector<20x4xf32>
    %3 = vector.extract_strided_slice %0 {offsets = [0, 4], sizes = [20, 1], strides = [1, 1]} : vector<20x8xf32> to vector<20x1xf32>
    %4 = vector.extract_strided_slice %0 {offsets = [0, 5], sizes = [20, 2], strides = [1, 1]} : vector<20x8xf32> to vector<20x2xf32>
    %5 = vector.extract_strided_slice %0 {offsets = [0, 7], sizes = [2, 1], strides = [1, 1]} : vector<20x8xf32> to vector<2x1xf32>
    %6 = vector.extract_strided_slice %2 {offsets = [0, 0], sizes = [20, 1], strides = [1, 1]} : vector<20x4xf32> to vector<20x1xf32>
    %7 = vector.extract_strided_slice %1 {offsets = [0, 0], sizes = [1, 128], strides = [1, 1]} : vector<4x128xf32> to vector<1x128xf32>
    %8 = vector.broadcast %6 : vector<20x1xf32> to vector<20x128xf32>
    %9 = vector.broadcast %7 : vector<1x128xf32> to vector<20x128xf32>
    %10 = arith.mulf %8, %9 : vector<20x128xf32>
    %11 = vector.extract_strided_slice %2 {offsets = [0, 1], sizes = [20, 1], strides = [1, 1]} : vector<20x4xf32> to vector<20x1xf32>
    %12 = vector.extract_strided_slice %1 {offsets = [1, 0], sizes = [1, 128], strides = [1, 1]} : vector<4x128xf32> to vector<1x128xf32>
    %13 = vector.broadcast %11 : vector<20x1xf32> to vector<20x128xf32>
    %14 = vector.broadcast %12 : vector<1x128xf32> to vector<20x128xf32>
    %15 = arith.mulf %13, %14 : vector<20x128xf32>
    %16 = arith.addf %10, %15 : vector<20x128xf32>
    %17 = vector.extract_strided_slice %2 {offsets = [0, 2], sizes = [20, 1], strides = [1, 1]} : vector<20x4xf32> to vector<20x1xf32>
    %18 = vector.extract_strided_slice %1 {offsets = [2, 0], sizes = [1, 128], strides = [1, 1]} : vector<4x128xf32> to vector<1x128xf32>
    %19 = vector.broadcast %17 : vector<20x1xf32> to vector<20x128xf32>
    %20 = vector.broadcast %18 : vector<1x128xf32> to vector<20x128xf32>
    %21 = arith.mulf %19, %20 : vector<20x128xf32>
    %22 = arith.addf %16, %21 : vector<20x128xf32>
    %23 = vector.extract_strided_slice %2 {offsets = [0, 3], sizes = [20, 1], strides = [1, 1]} : vector<20x4xf32> to vector<20x1xf32>
    %24 = vector.extract_strided_slice %1 {offsets = [3, 0], sizes = [1, 128], strides = [1, 1]} : vector<4x128xf32> to vector<1x128xf32>
    %25 = vector.broadcast %23 : vector<20x1xf32> to vector<20x128xf32>
    %26 = vector.broadcast %24 : vector<1x128xf32> to vector<20x128xf32>
    %27 = arith.mulf %25, %26 : vector<20x128xf32>
    %28 = arith.addf %22, %27 : vector<20x128xf32>
    %29 = vector.broadcast %3 : vector<20x1xf32> to vector<20x128xf32>
    %30 = arith.addf %28, %29 : vector<20x128xf32>
    %cst = arith.constant 0.000000e+00 : f32
    %31 = vector.broadcast %cst : f32 to vector<20x128xf32>
    %32 = arith.maximumf %30, %31 : vector<20x128xf32>
    %33 = vector.extract_strided_slice %4 {offsets = [0, 0], sizes = [20, 1], strides = [1, 1]} : vector<20x2xf32> to vector<20x1xf32>
    %34 = vector.broadcast %33 : vector<20x1xf32> to vector<20x128xf32>
    %35 = arith.mulf %32, %34 : vector<20x128xf32>
    %cst_3 = arith.constant dense<0.000000e+00> : vector<128xf32>
    %36 = vector.multi_reduction <add>, %35, %cst_3 [0] : vector<20x128xf32> to vector<128xf32>
    %37 = vector.shape_cast %36 : vector<128xf32> to vector<1x128xf32>
    %38 = vector.extract_strided_slice %4 {offsets = [0, 1], sizes = [20, 1], strides = [1, 1]} : vector<20x2xf32> to vector<20x1xf32>
    %39 = vector.broadcast %38 : vector<20x1xf32> to vector<20x128xf32>
    %40 = arith.mulf %32, %39 : vector<20x128xf32>
    %cst_4 = arith.constant dense<0.000000e+00> : vector<128xf32>
    %41 = vector.multi_reduction <add>, %40, %cst_4 [0] : vector<20x128xf32> to vector<128xf32>
    %42 = vector.shape_cast %41 : vector<128xf32> to vector<1x128xf32>
    %43 = tpu.concatenate %37, %42 in 0 : vector<1x128xf32>, vector<1x128xf32> -> vector<2x128xf32>
    %44 = vector.broadcast %5 : vector<2x1xf32> to vector<2x128xf32>
    %45 = arith.addf %43, %44 : vector<2x128xf32>
    %c0_5 = arith.constant 0 : index
    %c0_6 = arith.constant 0 : index
    %46 = vector.load %arg3[%c0_5, %c0_6] : memref<2x128xf32, #tpu.memory_space<vmem>>, vector<2x128xf32>
    tpu.vector_store %arg3[%c0_5, %c0_6], %45 {strides = array<i32>} : memref<2x128xf32, #tpu.memory_space<vmem>>, vector<2x128xf32>,
    return
  }
  func.func @transform_0(%arg0: i32) -> (i32, i32) {
    %c0_i32 = arith.constant 0 : i32
    %c0_i32_0 = arith.constant 0 : i32
    %c0_i32_1 = arith.constant 0 : i32
    return %c0_i32, %c0_i32_0 : i32, i32
  }
  func.func @transform_1(%arg0: i32) -> (i32, i32) {
    %c0_i32 = arith.constant 0 : i32
    %c0_i32_0 = arith.constant 0 : i32
    return %c0_i32, %arg0 : i32, i32
  }
  func.func @transform_2(%arg0: i32) -> (i32, i32) {
    %c0_i32 = arith.constant 0 : i32
    %c0_i32_0 = arith.constant 0 : i32
    return %c0_i32, %arg0 : i32, i32
  }
}

</mosaic_0001>

<llo_original>
// kernel: tpu_custom_call.1
$region0: #{tpu_custom_call.1}
  #allocation0 [shape = 'u32[]', space=smem, size = 0x4, offset = 0x4, fixed_abs, tag = 'smem constant byte address 0x4 - core index']
  #allocation1 [shape = 'u32[144,128]{1,0:T(1,128)}', space=vmem, size = 0x12000, scoped, tag = 'internal scratch']
  %s0 = inlined_call_operand.vmem [shape: f32[20,8], index: 0, kind: input, shape index: {}]
  %s1 = inlined_call_operand.vmem [shape: f32[4,384], index: 1, kind: input, shape index: {}]
  %s2 = inlined_call_operand.hbm [shape: f32[2,384], index: 2, kind: output, shape index: {}]
  %s3 = sld [smem:[#allocation0]]
  $region41: #{tpu_custom_call.1} parent=0
    _
  %s5 = ssub.s32 1, %s3
  %s6 = scalar_select 0, %s5, %s3
  $region1: #{tpu_custom_call.1} parent=0
    #allocation2 [shape = 'u8[2048]{0}', space=vmem, size = 0x800, scoped, tag = 'output window, operand 0']
    #allocation3 [shape = 's32[2]{0}', space=sflag, size = 0x8, scoped, tag = 'scoped memory for tpu_custom_call.1']
    %7 = vsyncpa [#allocation3], 0
    %s8 = scalar_lea.sflag [#allocation3], 1
    %9 = vsyncpa %s8, 0
    loop: start=0, step=1, limit=5
    $region2: #{tpu_custom_call.1} parent=1 // loop_pre_header
      _
    $region3: #{tpu_custom_call.1} parent=1 // loop_header
      %s11 = sphi 0, %s15
      %p12 = scmp.ge.s32.totalorder %s11, 5
      %s19 = sphi 0, %s19
      %s21 = sphi 0, %s19
      %s22 = sphi 0, %s21
      %s36 = sphi 0, %s22
      %s42 = sphi 0, %s44
      %s45 = sphi 0, %s42
      %s46 = sphi 0, %s45
      %s62 = sphi 0, %s46
      %s68 = sphi 0, %s70
      %s71 = sphi 0, %s68
      %s72 = sphi 0, %s71
      %s88 = sphi 0, %s72
    $region4: #{tpu_custom_call.1} parent=1 // loop_header_branch
      %14 = sbr.rel (%p12) target = $region8
    $region5: #{tpu_custom_call.1} parent=1 // loop_body
      %s16 = ssub.s32 %s11, 1
      %s17 = ssub.s32 %s11, 2
      %s18 = sadd.s32 %s11, 1
      %s20 = sadd.s32 %s19, 1
      %p23 = scmp.eq.s32.totalorder %s11, 2
      %p24 = scmp.ne.s32.totalorder %s19, %s21
      %p25 = scmp.eq.s32.totalorder %s11, 0
      %p26 = por %p24, %p25
      %p27 = scmp.ne.s32.totalorder %s19, %s21
      %p28 = scmp.eq.s32.totalorder %s16, 2
      %p29 = por %p27, %p28
      %p30 = scmp.ne.s32.totalorder %s21, %s22
      %p31 = scmp.eq.s32.totalorder %s16, 0
      %p32 = por %p30, %p31
      %p33 = scmp.ne.s32.totalorder %s21, %s22
      %p34 = scmp.eq.s32.totalorder %s17, 2
      %p35 = por %p33, %p34
      %p37 = scmp.ne.s32.totalorder %s22, %s36
      %p38 = scmp.eq.s32.totalorder %s17, 0
      %p39 = por %p37, %p38
      %s40 = ssub.s32 %s11, %s18
      %p41 = scmp.eq.s32.totalorder %s40, 0
      %s43 = sadd.s32 %s42, 1
      %s44 = scalar_select %p41, %s42, %s43
      %p47 = pneg %p41
      %p48 = scmp.eq.s32.totalorder %s11, 2
      %p49 = por %p47, %p48
      %p50 = scmp.ne.s32.totalorder %s42, %s45
      %p51 = scmp.eq.s32.totalorder %s11, 0
      %p52 = por %p50, %p51
      %p53 = scmp.ne.s32.totalorder %s42, %s45
      %p54 = scmp.eq.s32.totalorder %s16, 2
      %p55 = por %p53, %p54
      %p56 = scmp.ne.s32.totalorder %s45, %s46
      %p57 = scmp.eq.s32.totalorder %s16, 0
      %p58 = por %p56, %p57
      %p59 = scmp.ne.s32.totalorder %s45, %s46
      %p60 = scmp.eq.s32.totalorder %s17, 2
      %p61 = por %p59, %p60
      %p63 = scmp.ne.s32.totalorder %s46, %s62
      %p64 = scmp.eq.s32.totalorder %s17, 0
      %p65 = por %p63, %p64
      %s66 = ssub.s32 %s11, %s18
      %p67 = scmp.eq.s32.totalorder %s66, 0
      %s69 = sadd.s32 %s68, 1
      %s70 = scalar_select %p67, %s68, %s69
      %p73 = pneg %p67
      %p74 = scmp.eq.s32.totalorder %s11, 2
      %p75 = por %p73, %p74
      %p76 = scmp.ne.s32.totalorder %s68, %s71
      %p77 = scmp.eq.s32.totalorder %s11, 0
      %p78 = por %p76, %p77
      %p79 = scmp.ne.s32.totalorder %s68, %s71
      %p80 = scmp.eq.s32.totalorder %s16, 2
      %p81 = por %p79, %p80
      %p82 = scmp.ne.s32.totalorder %s71, %s72
      %p83 = scmp.eq.s32.totalorder %s16, 0
      %p84 = por %p82, %p83
      %p85 = scmp.ne.s32.totalorder %s71, %s72
      %p86 = scmp.eq.s32.totalorder %s17, 2
      %p87 = por %p85, %p86
      %p89 = scmp.ne.s32.totalorder %s72, %s88
      %p90 = scmp.eq.s32.totalorder %s17, 0
      %p91 = por %p89, %p90
      %p92 = scmp.le.s32.totalorder 1, %s11
      %p93 = scmp.lt.s32.totalorder %s11, 4
      %p94 = pnand %p92, %p93
      %p95 = pneg %p94
      // Predicated region
      $region9: #{tpu_custom_call.1} parent=5 // pred_check
        _
      $region10: #{tpu_custom_call.1} parent=5 // pred_check_branch
        %97 = sbr.rel (%p94) target = $region12
      $region11: #{tpu_custom_call.1} parent=5 // pred_region
        %s98 = ssub.s32 %s11, 1
        // Predicated region
        $region13: #{tpu_custom_call.1} parent=11 // pred_check
          %p99 = pneg %p32
        $region14: #{tpu_custom_call.1} parent=11 // pred_check_branch
          %101 = sbr.rel (%p99) target = $region16
        $region15: #{tpu_custom_call.1} parent=11 // pred_region
          _
        $region16: #{tpu_custom_call.1} parent=11 // pred_fallthru
          _
      $region12: #{tpu_custom_call.1} parent=5 // pred_fallthru
        _
      %p102 = scmp.lt.s32.totalorder %s11, 3
      // Predicated region
      $region17: #{tpu_custom_call.1} parent=5 // pred_check
        %p103 = pneg %p102
      $region18: #{tpu_custom_call.1} parent=5 // pred_check_branch
        %105 = sbr.rel (%p103) target = $region20
      $region19: #{tpu_custom_call.1} parent=5 // pred_region
        // Predicated region
        $region21: #{tpu_custom_call.1} parent=19 // pred_check
          %p106 = pneg %p52
        $region22: #{tpu_custom_call.1} parent=19 // pred_check_branch
          %108 = sbr.rel (%p106) target = $region24
        $region23: #{tpu_custom_call.1} parent=19 // pred_region
          %p109 = scmp.lt.s32.totalorder %s11, 2
          %s110 = scalar_select %p109, %s11, 2
          %s111 = smul.addr %s110, 4
          %s112 = scalar_lea.vmem %s1, %s111
        $region24: #{tpu_custom_call.1} parent=19 // pred_fallthru
          _
      $region20: #{tpu_custom_call.1} parent=5 // pred_fallthru
        _
      %p113 = scmp.le.s32.totalorder 1, %s11
      %p114 = scmp.lt.s32.totalorder %s11, 4
      %p115 = pnand %p113, %p114
      %p116 = pneg %p115
      // Predicated region
      $region25: #{tpu_custom_call.1} parent=5 // pred_check
        _
      $region26: #{tpu_custom_call.1} parent=5 // pred_check_branch
        %118 = sbr.rel (%p115) target = $region28
      $region27: #{tpu_custom_call.1} parent=5 // pred_region
        %s119 = ssub.s32 %s11, 1
        %p120 = pneg %p32
        %p121 = pneg %p29
        %p122 = scmp.lt.s32.totalorder %s16, 2
        %s123 = scalar_select %p122, %s16, 2
        %s124 = smul.addr %s123, 4
        %s125 = scalar_lea.vmem %s1, %s124
        %p126 = pneg %p58
        %p127 = pneg %p55
        %p128 = pneg %p84
        %p129 = pneg %p81
        %s130 = sand.u32 %s71, 1
        %s131 = scalar_lea.sflag [#allocation3], %s130
        %s132 = sand.u32 %s71, 1
        %s133 = smul.addr %s132, 2
        %s134 = scalar_lea.vmem [#allocation2], %s133
        %p135 = scmp.lt.s32.totalorder %s16, 2
        %s136 = scalar_select %p135, %s16, 2
        %s137 = smul.addr %s136, 4
        %s138 = scalar_lea.vmem %s1, %s137
        %v139 = vld [vmem:[%s0] sm:$0xff]
        %v140 = vld [vmem:[%s0 + $0x8] sm:$0xff]
        %v141 = vld [vmem:[%s0 + $0x10] sm:$0xf]
        %v142 = vld [vmem:[%s138] sm:$0xf]
        %144 = vset.pattern.permute.xlu0 0
        %145 = vperm.xlu0 %144, %v139
        %v146 = vpop.permute.xlu0 %145
        %149 = vset.pattern.permute.xlu0 0
        %150 = vperm.xlu0 %149, %v140
        %v151 = vpop.permute.xlu0 %150
        %154 = vset.pattern.permute.xlu0 0
        %155 = vperm.xlu0 %154, %v141
        %v156 = vpop.permute.xlu0 %155
        %v158 = vlaneseq
        %v159 = vshrl.u32 %v158, 7
        %v160 = vsub.s32 0, %v159
        %v161 = vrot.slane %v142, %v160
        %v162 = vmul.f32 %v146, %v161
        %v163 = vmul.f32 %v151, %v161
        %v164 = vmul.f32 %v156, %v161
        %165 = vset.pattern.permute.xlu0 1
        %166 = vperm.xlu0 %165, %v139
        %v167 = vpop.permute.xlu0 %166
        %169 = vset.pattern.permute.xlu0 1
        %170 = vperm.xlu0 %169, %v140
        %v171 = vpop.permute.xlu0 %170
        %173 = vset.pattern.permute.xlu0 1
        %174 = vperm.xlu0 %173, %v141
        %v175 = vpop.permute.xlu0 %174
        %v177 = vlaneseq
        %v178 = vshrl.u32 %v177, 7
        %v179 = vsub.s32 1, %v178
        %v180 = vrot.slane %v142, %v179
        %v181 = vmul.f32 %v167, %v180
        %v182 = vmul.f32 %v171, %v180
        %v183 = vmul.f32 %v175, %v180
        %v184 = vadd.f32 %v162, %v181
        %v185 = vadd.f32 %v163, %v182
        %v186 = vadd.f32 %v164, %v183
        %187 = vset.pattern.permute.xlu0 2
        %188 = vperm.xlu0 %187, %v139
        %v189 = vpop.permute.xlu0 %188
        %191 = vset.pattern.permute.xlu0 2
        %192 = vperm.xlu0 %191, %v140
        %v193 = vpop.permute.xlu0 %192
        %195 = vset.pattern.permute.xlu0 2
        %196 = vperm.xlu0 %195, %v141
        %v197 = vpop.permute.xlu0 %196
        %v199 = vlaneseq
        %v200 = vshrl.u32 %v199, 7
        %v201 = vsub.s32 2, %v200
        %v202 = vrot.slane %v142, %v201
        %v203 = vmul.f32 %v189, %v202
        %v204 = vmul.f32 %v193, %v202
        %v205 = vmul.f32 %v197, %v202
        %v206 = vadd.f32 %v184, %v203
        %v207 = vadd.f32 %v185, %v204
        %v208 = vadd.f32 %v186, %v205
        %209 = vset.pattern.permute.xlu0 3
        %210 = vperm.xlu0 %209, %v139
        %v211 = vpop.permute.xlu0 %210
        %213 = vset.pattern.permute.xlu0 3
        %214 = vperm.xlu0 %213, %v140
        %v215 = vpop.permute.xlu0 %214
        %217 = vset.pattern.permute.xlu0 3
        %218 = vperm.xlu0 %217, %v141
        %v219 = vpop.permute.xlu0 %218
        %v221 = vlaneseq
        %v222 = vshrl.u32 %v221, 7
        %v223 = vsub.s32 3, %v222
        %v224 = vrot.slane %v142, %v223
        %v225 = vmul.f32 %v211, %v224
        %v226 = vmul.f32 %v215, %v224
        %v227 = vmul.f32 %v219, %v224
        %v228 = vadd.f32 %v206, %v225
        %v229 = vadd.f32 %v207, %v226
        %v230 = vadd.f32 %v208, %v227
        %231 = vset.pattern.permute.xlu0 4
        %232 = vperm.xlu0 %231, %v139
        %v233 = vpop.permute.xlu0 %232
        %235 = vset.pattern.permute.xlu0 4
        %236 = vperm.xlu0 %235, %v140
        %v237 = vpop.permute.xlu0 %236
        %239 = vset.pattern.permute.xlu0 4
        %240 = vperm.xlu0 %239, %v141
        %v241 = vpop.permute.xlu0 %240
        %v243 = vadd.f32 %v228, %v233
        %v244 = vadd.f32 %v229, %v237
        %v245 = vadd.f32 %v230, %v241
        %v246 = vmax.f32 %v243, 0.0
        %v247 = vmax.f32 %v244, 0.0
        %v248 = vmax.f32 %v245, 0.0
        %249 = vset.pattern.permute.xlu0 5
        %250 = vperm.xlu0 %249, %v139
        %v251 = vpop.permute.xlu0 %250
        %253 = vset.pattern.permute.xlu0 5
        %254 = vperm.xlu0 %253, %v140
        %v255 = vpop.permute.xlu0 %254
        %257 = vset.pattern.permute.xlu0 5
        %258 = vperm.xlu0 %257, %v141
        %v259 = vpop.permute.xlu0 %258
        %v261 = vmul.f32 %v246, %v251
        %v262 = vmul.f32 %v247, %v255
        %v263 = vmul.f32 %v248, %v259
        %v264 = vadd.f32 %v261, %v262
        %vm265 = vcmask 1043456
        %v266 = vsel %vm265, %v263, 0.0
        %v267 = vadd.f32 %v264, %v266
        %v268 = vrot.slane %v267, 4
        %v269 = vadd.f32 %v267, %v268
        %v270 = vrot.slane %v269, 2
        %v271 = vadd.f32 %v269, %v270
        %v272 = vrot.slane %v271, 1
        %v273 = vadd.f32 %v271, %v272
        %274 = vset.pattern.permute.xlu0 6
        %275 = vperm.xlu0 %274, %v139
        %v276 = vpop.permute.xlu0 %275
        %278 = vset.pattern.permute.xlu0 6
        %279 = vperm.xlu0 %278, %v140
        %v280 = vpop.permute.xlu0 %279
        %282 = vset.pattern.permute.xlu0 6
        %283 = vperm.xlu0 %282, %v141
        %v284 = vpop.permute.xlu0 %283
        %v286 = vmul.f32 %v246, %v276
        %v287 = vmul.f32 %v247, %v280
        %v288 = vmul.f32 %v248, %v284
        %v289 = vadd.f32 %v286, %v287
        %v290 = vsel %vm265, %v288, 0.0
        %v291 = vadd.f32 %v289, %v290
        %v292 = vrot.slane %v291, 4
        %v293 = vadd.f32 %v291, %v292
        %v294 = vrot.slane %v293, 2
        %v295 = vadd.f32 %v293, %v294
        %v296 = vrot.slane %v295, 1
        %v297 = vadd.f32 %v295, %v296
        %vm298 = vcmask 1040384
        %v299 = vsel %vm298, %v273, %v297
        %300 = vset.pattern.permute.xlu0 7
        %301 = vperm.xlu0 %300, %v139
        %v302 = vpop.permute.xlu0 %301
        %v304 = vadd.f32 %v299, %v302
        %305 = vst [vmem:[%s134] sm:$0x3] %v304
        %s306 = sand.u32 %s71, 1
        %s307 = scalar_lea.sflag [#allocation3], %s306
        %s308 = sand.u32 %s71, 1
        %s309 = smul.addr %s308, 2
        %s310 = scalar_lea.vmem [#allocation2], %s309
        // Predicated region
        $region29: #{tpu_custom_call.1} parent=27 // pred_check
          %p311 = pneg %p81
        $region30: #{tpu_custom_call.1} parent=27 // pred_check_branch
          %313 = sbr.rel (%p311) target = $region32
        $region31: #{tpu_custom_call.1} parent=27 // pred_region
          %s315 = ssub.s32 32, 32
          %316 = vsyncadd %s307, %s315
          %s317 = smul.addr %s16, 32
          %s318 = scalar_lea.hbm %s2, %s317
          %s320 = sshll.u32 %s310, 4
          %s321 = int_to_ptr.vmem [resolvable:$true] %s320
          %323 = dma.vmem_to_hbm [thread:$0]  %s321, 32, %s318, %s307
        $region32: #{tpu_custom_call.1} parent=27 // pred_fallthru
          _
      $region28: #{tpu_custom_call.1} parent=5 // pred_fallthru
        _
      %p324 = scmp.le.s32.totalorder 2, %s11
      // Predicated region
      $region33: #{tpu_custom_call.1} parent=5 // pred_check
        %p325 = pneg %p324
      $region34: #{tpu_custom_call.1} parent=5 // pred_check_branch
        %327 = sbr.rel (%p325) target = $region36
      $region35: #{tpu_custom_call.1} parent=5 // pred_region
        %s328 = ssub.s32 %s11, 2
        // Predicated region
        $region37: #{tpu_custom_call.1} parent=35 // pred_check
          %p329 = pneg %p87
        $region38: #{tpu_custom_call.1} parent=35 // pred_check_branch
          %331 = sbr.rel (%p329) target = $region40
        $region39: #{tpu_custom_call.1} parent=35 // pred_region
          %s332 = sand.u32 %s72, 1
          %s333 = scalar_lea.sflag [#allocation3], %s332
          %s334 = sand.u32 %s72, 1
          %s335 = smul.addr %s334, 2
          %s336 = scalar_lea.vmem [#allocation2], %s335
          %337 = dma.done %s333, 32
        $region40: #{tpu_custom_call.1} parent=35 // pred_fallthru
          _
      $region36: #{tpu_custom_call.1} parent=5 // pred_fallthru
        _
    $region6: #{tpu_custom_call.1} parent=1 // loop_footer
      %s15 = sadd.s32 1, %s11
    $region7: #{tpu_custom_call.1} parent=1 // loop_footer_branch
      %10 = sbr.rel target = $region3
    $region8: #{tpu_custom_call.1} parent=1 // loop_exit
      _
    %338 = vsyncpa [#allocation3], 1
    %s339 = scalar_lea.sflag [#allocation3], 1
    %340 = vsyncpa %s339, 1

</llo_original>
